<compile_context>
chip_gen: v6e
topology: v6e:2x2x1
jax: 0.10.0
libtpu: 0.0.40
codegen_flags: <defaults>
</compile_context>

<pallas_src>
import functools

import numpy as np
import jax
import jax.numpy as jnp
from jax.experimental import pallas as pl
from jax.experimental.pallas import tpu as pltpu

_HALO_CHUNKS = 8  # extra chunks DMA'd per tile (>=1 needed; 8 keeps (8,128) alignment)


# --------------------------------------------------------------------------
# Deterministic filter construction (mirrors the PyTorch module's __init__).
# Host-side numpy; runs once at init time.
# --------------------------------------------------------------------------
def prototype_filter(len_filter, cutoff):
    len_range = np.arange(len_filter)
    beta = 14
    w = np.kaiser(len_filter, beta)
    with np.errstate(divide="ignore", invalid="ignore"):
        v = np.divide(
            np.sin(cutoff * (len_range - 0.5 * len_filter)),
            np.pi * (len_range - 0.5 * len_filter),
        )
    if len_filter % 2 == 0:
        v[int(len_filter / 2)] = cutoff / np.pi
    return np.multiply(v, w)


def cos_modulation(n, k, n_band, m):
    # NOTE: phi_k = (-1)**k + pi/4 is a verbatim transcription of the PyTorch
    # module (standard PQMF uses (-1)**k * pi/4); kept faithful to the spec.
    phi_k = (-1) ** k + np.pi / 4
    return np.cos((k + 0.5) * (n - (m - 1) / 2) * (np.pi / n_band) + phi_k)


def compute_analysis_filters(n_band=16, n_taps=8):
    len_filter = n_band * n_taps
    cutoff = np.pi / n_band
    h_analysis = np.zeros((n_band, len_filter))
    h_analysis[0] = prototype_filter(len_filter, cutoff)
    scale = np.arange(len_filter)
    for k in np.arange(1, n_band):
        h_analysis[k] = np.multiply(
            h_analysis[0], cos_modulation(scale, k, n_band, len_filter)
        )
    return h_analysis  # (n_band, len_filter)


def fold_analysis_filters(h):
    """Fold the strided-conv taps into two (L, L) matrices (host-side, init time).

    Chunk the zero-padded signal into L-sample chunks X[m, j] = x_pad[m*L + j].
    With P = L // n_band output frames per chunk, output frame o = m*P + c of
    band k is
        y[k, o] = sum_j X[m, j] * A[j, k*P + c]  +  X[m+1, j] * B[j, k*P + c]
    """
    h = np.asarray(h, np.float64)
    n_band, L = h.shape
    P = L // n_band
    A = np.zeros((L, L), np.float64)
    B = np.zeros((L, L), np.float64)
    for c in range(P):
        s = c * n_band  # window start offset inside chunk m
        for k in range(n_band):
            q = k * P + c
            A[s:, q] = h[k, : L - s]
            if s > 0:
                B[:s, q] = h[k, L - s:]
    return A, B


def _round_up(a, b):
    return -(-a // b) * b


# --------------------------------------------------------------------------
# Pallas kernel: two lane-dense MXU matmuls against resident folded weights.
# --------------------------------------------------------------------------
def _pqmf_kernel(xm_ref, xh_ref, a_ref, b_ref, o_ref):
    # xm_ref: (1, tile_m, L)        chunks of this tile          (compute dtype)
    # xh_ref: (1, _HALO_CHUNKS, L)  chunks right after the tile  (compute dtype)
    # a_ref, b_ref: (L, L)          folded filters, VMEM-resident
    # o_ref:  (1, tile_m, L)        interleaved output Y[m, k*P + c]
    xm = xm_ref[0]
    xh = xh_ref[0]
    ya = jnp.dot(xm, a_ref[...], preferred_element_type=jnp.float32)
    yb = jnp.dot(xm, b_ref[...], preferred_element_type=jnp.float32)
    yh = jnp.dot(xh, b_ref[...], preferred_element_type=jnp.float32)
    # Chunk m needs the B-term of chunk m+1 -> shift the f32 result up one row
    # (cheap sublane relayout; keeps all shuffles off the packed bf16 inputs).
    yb_next = jnp.concatenate([yb[1:], yh[:1]], axis=0)
    o_ref[0] = (ya + yb_next).astype(o_ref.dtype)


@functools.partial(
    jax.jit, static_argnames=("n_band", "tile_m", "compute_dtype", "out_dtype")
)
def _pqmf_forward_impl(x, a_mat, b_mat, *, n_band, tile_m, compute_dtype, out_dtype):
    Bsz, C, T = x.shape
    assert C == 1, "PQMF analysis expects a single input channel"
    L = a_mat.shape[0]
    P = L // n_band                    # output frames per chunk
    O = T // n_band                    # valid output frames (conv[..., :-1])

    n_chunks = -(-O // P)
    num_tiles = -(-n_chunks // tile_m)
    Mc_out = num_tiles * tile_m        # chunks actually computed
    Mc_total = Mc_out + _HALO_CHUNKS   # + halo for the last tile
    pad_left = L // 2
    pad_right = Mc_total * L - T - pad_left

    # Single fused wrapper input pass: pad + cast (the chunk reshape is free).
    x1 = x[:, 0, :]
    x_pad = jnp.pad(x1, ((0, 0), (pad_left, pad_right))).astype(compute_dtype)
    x_chunks = x_pad.reshape(Bsz, Mc_total, L)

    a_c = a_mat.astype(compute_dtype)
    b_c = b_mat.astype(compute_dtype)

    in_b = jnp.dtype(compute_dtype).itemsize
    out_b = jnp.dtype(out_dtype).itemsize
    cost = pl.CostEstimate(
        flops=4 * Bsz * Mc_out * L * L,  # two (tile_m, L) @ (L, L) matmuls / tile
        transcendentals=0,
        bytes_accessed=(Bsz * Mc_out * L                      # main chunks
                        + Bsz * num_tiles * _HALO_CHUNKS * L  # halo re-reads
                        + 2 * L * L) * in_b                   # folded weights
                       + Bsz * Mc_out * L * out_b,            # output
    )

    out_i = pl.pallas_call(
        _pqmf_kernel,
        out_shape=jax.ShapeDtypeStruct((Bsz, Mc_out, L), out_dtype),
        grid=(num_tiles, Bsz),  # tile axis first -> v7x megacore shards it
        in_specs=[
            # main chunk tile
            pl.BlockSpec((1, tile_m, L), lambda i, b: (b, i, 0)),
            # halo: the _HALO_CHUNKS chunks right after this tile (same array)
            pl.BlockSpec(
                (1, _HALO_CHUNKS, L),
                lambda i, b: (b, (i + 1) * (tile_m // _HALO_CHUNKS), 0),
            ),
            # folded filters, VMEM-resident across the whole grid
            pl.BlockSpec((L, L), lambda i, b: (0, 0)),
            pl.BlockSpec((L, L), lambda i, b: (0, 0)),
        ],
        out_specs=pl.BlockSpec((1, tile_m, L), lambda i, b: (b, i, 0)),
        compiler_params=pltpu.CompilerParams(
            dimension_semantics=("parallel", "parallel"),
            vmem_limit_bytes=32 * 1024 * 1024,  # conservative; v7x has 64 MiB physical
        ),
        cost_estimate=cost,
    )(x_chunks, x_chunks, a_c, b_c)

    # De-interleave Y[b, m, k*P + c] -> y[b, k, m*P + c]: one cheap XLA pass.
    # Consumers that accept the interleaved (B, chunks, L) layout can skip it.
    out = (
        out_i.reshape(Bsz, Mc_out, n_band, P)
        .transpose(0, 2, 1, 3)
        .reshape(Bsz, n_band, Mc_out * P)
    )
    return out[:, :, :O]  # crop the padded tail -> (B, n_band, T // n_band)


def pqmf_forward(x, h_analysis, *, tile_m=None, compute_dtype=jnp.bfloat16,
                 out_dtype=jnp.float32):
    """PQMF.forward.  x: (B, 1, T); h_analysis: (n_band, L) analysis filters.

    compute_dtype: MXU operand dtype (bf16 fast path on v5e/v6e/v7x; pass
      float32 for bit-accurate validation).  Accumulation is always float32.
    out_dtype: dtype the kernel writes and the function returns; bf16 halves
      output HBM traffic when downstream tolerates it.
    """
    h = np.asarray(h_analysis, np.float64)
    n_band, L = h.shape
    P = L // n_band
    T = x.shape[-1]
    O = T // n_band
    if O == 0:  # T < n_band edge case: empty output, no kernel launch
        return jnp.zeros((x.shape[0], n_band, 0), out_dtype)

    if tile_m is None:
        # Big default tile (8192 output frames at n_band=16, n_taps=8) to
        # amortize per-grid-step overhead and shrink halo re-reads; still only
        # a few MiB of VMEM per step.
        tile_m = min(1024, _round_up(-(-O // P), _HALO_CHUNKS))
    assert tile_m % _HALO_CHUNKS == 0 and tile_m >= _HALO_CHUNKS

    a_np, b_np = fold_analysis_filters(h)  # init-time host work
    a_mat = jnp.asarray(a_np, jnp.float32)
    b_mat = jnp.asarray(b_np, jnp.float32)
    return _pqmf_forward_impl(
        x, a_mat, b_mat, n_band=n_band, tile_m=tile_m,
        compute_dtype=compute_dtype, out_dtype=out_dtype,
    )


# --------------------------------------------------------------------------
# Pure-JAX reference of the exact PyTorch conv1d semantics (cross-correlation,
# stride=n_band, symmetric zero padding, trailing slice).
# --------------------------------------------------------------------------
def pqmf_forward_ref(x, h):
    h = jnp.asarray(np.asarray(h), jnp.float32)
    n_band, L = h.shape
    wt = h[:, None, :]  # (n_band, 1, L)
    y = jax.lax.conv_general_dilated(
        x.astype(jnp.float32),
        wt,
        window_strides=(n_band,),
        padding=[(L // 2, L // 2)],
        dimension_numbers=("NCH", "OIH", "NCH"),
    )
    return y[..., :-1]


if __name__ == "__main__":
    n_band, n_taps = 16, 8
    h_analysis = compute_analysis_filters(n_band=n_band, n_taps=n_taps)  # (16, 128)

    key = jax.random.PRNGKey(0)

    # Case 1: multi-tile grid (tile_m=8 -> 2 tiles), f32 operands, strict check.
    Bsz, T = 2, 2048  # O = 128 output frames
    x = jax.random.normal(key, (Bsz, 1, T), dtype=jnp.float32)
    out = jax.block_until_ready(
        pqmf_forward(x, h_analysis, tile_m=8, compute_dtype=jnp.float32)
    )
    ref = jax.block_until_ready(pqmf_forward_ref(x, h_analysis))
    assert out.shape == (Bsz, n_band, T // n_band), out.shape
    assert np.allclose(np.asarray(out), np.asarray(ref), atol=2e-4, rtol=2e-4)

    # Case 2: default tiling, bf16 MXU operands (fast path), loose check.
    out_bf = jax.block_until_ready(pqmf_forward(x, h_analysis))
    assert out_bf.shape == (Bsz, n_band, T // n_band), out_bf.shape
    assert np.allclose(np.asarray(out_bf), np.asarray(ref), atol=2e-2, rtol=2e-2)

    # Case 2b: bf16 kernel output (halves output HBM traffic), looser check.
    out_b16 = jax.block_until_ready(
        pqmf_forward(x, h_analysis, out_dtype=jnp.bfloat16)
    )
    assert out_b16.dtype == jnp.bfloat16
    assert np.allclose(
        np.asarray(out_b16).astype(np.float32), np.asarray(ref), atol=5e-2, rtol=5e-2
    )

    # Case 3: T not a multiple of n_band, single-tile path, f32 strict check.
    x2 = jax.random.normal(jax.random.PRNGKey(1), (1, 1, 1000), dtype=jnp.float32)
    out2 = jax.block_until_ready(
        pqmf_forward(x2, h_analysis, compute_dtype=jnp.float32)
    )
    ref2 = jax.block_until_ready(pqmf_forward_ref(x2, h_analysis))
    assert out2.shape == (1, n_band, 1000 // n_band), out2.shape
    assert np.allclose(np.asarray(out2), np.asarray(ref2), atol=2e-4, rtol=2e-4)

    # Case 4: T < n_band edge case -> empty output, no kernel launch.
    x3 = jnp.zeros((1, 1, 10), jnp.float32)
    out3 = pqmf_forward(x3, h_analysis)
    assert out3.shape == (1, n_band, 0), out3.shape

    print("KERNEL_OK")
</pallas_src>

<mosaic_0001>
module attributes {stable_mosaic.version = 11 : i64} {
  func.func @_pqmf_kernel(%arg0: i32, %arg1: i32, %arg2: memref<1x8x128xf32, #tpu.memory_space<vmem>>, %arg3: memref<1x8x128xf32, #tpu.memory_space<vmem>>, %arg4: memref<128x128xf32, #tpu.memory_space<vmem>>, %arg5: memref<128x128xf32, #tpu.memory_space<vmem>>, %arg6: memref<1x8x128xf32, #tpu.memory_space<vmem>>) attributes {dimension_semantics = [#tpu.dimension_semantics<parallel>, #tpu.dimension_semantics<parallel>], iteration_bounds = array<i64: 2, 2>, scalar_prefetch = 0 : i64, scratch_operands = 0 : i64, tpu.core_type = #tpu.core_type<tc>, window_params = [{transform_indices = @transform_0, window_bounds = array<i64: 1, 8, 128>}, {transform_indices = @transform_1, window_bounds = array<i64: 1, 8, 128>}, {pipeline_mode = #tpu.pipeline_mode<synchronous>, transform_indices = @transform_2, window_bounds = array<i64: 128, 128>}, {pipeline_mode = #tpu.pipeline_mode<synchronous>, transform_indices = @transform_3, window_bounds = array<i64: 128, 128>}, {transform_indices = @transform_4, window_bounds = array<i64: 1, 8, 128>}]} {
    %c0 = arith.constant 0 : index
    %c0_0 = arith.constant 0 : index
    %c0_1 = arith.constant 0 : index
    %0 = vector.load %arg2[%c0, %c0_0, %c0_1] : memref<1x8x128xf32, #tpu.memory_space<vmem>>, vector<1x8x128xf32>
    %1 = vector.shape_cast %0 : vector<1x8x128xf32> to vector<8x128xf32>
    %c0_2 = arith.constant 0 : index
    %c0_3 = arith.constant 0 : index
    %c0_4 = arith.constant 0 : index
    %2 = vector.load %arg3[%c0_2, %c0_3, %c0_4] : memref<1x8x128xf32, #tpu.memory_space<vmem>>, vector<1x8x128xf32>
    %3 = vector.shape_cast %2 : vector<1x8x128xf32> to vector<8x128xf32>
    %c0_5 = arith.constant 0 : index
    %c0_6 = arith.constant 0 : index
    %4 = vector.load %arg4[%c0_5, %c0_6] : memref<128x128xf32, #tpu.memory_space<vmem>>, vector<128x128xf32>
    %cst = arith.constant dense<0.000000e+00> : vector<8x128xf32>
    %5 = tpu.matmul %1, %4, %cst {dimension_numbers = #tpu.dot_dimension_numbers<[1], [0], [0], [1], [0, 0, 1, 1], [], []>} : vector<8x128xf32>, vector<128x128xf32>, vector<8x128xf32> -> vector<8x128xf32>
    %c0_7 = arith.constant 0 : index
    %c0_8 = arith.constant 0 : index
    %6 = vector.load %arg5[%c0_7, %c0_8] : memref<128x128xf32, #tpu.memory_space<vmem>>, vector<128x128xf32>
    %cst_9 = arith.constant dense<0.000000e+00> : vector<8x128xf32>
    %7 = tpu.matmul %1, %6, %cst_9 {dimension_numbers = #tpu.dot_dimension_numbers<[1], [0], [0], [1], [0, 0, 1, 1], [], []>} : vector<8x128xf32>, vector<128x128xf32>, vector<8x128xf32> -> vector<8x128xf32>
    %c0_10 = arith.constant 0 : index
    %c0_11 = arith.constant 0 : index
    %8 = vector.load %arg5[%c0_10, %c0_11] : memref<128x128xf32, #tpu.memory_space<vmem>>, vector<128x128xf32>
    %cst_12 = arith.constant dense<0.000000e+00> : vector<8x128xf32>
    %9 = tpu.matmul %3, %8, %cst_12 {dimension_numbers = #tpu.dot_dimension_numbers<[1], [0], [0], [1], [0, 0, 1, 1], [], []>} : vector<8x128xf32>, vector<128x128xf32>, vector<8x128xf32> -> vector<8x128xf32>
    %10 = vector.extract_strided_slice %7 {offsets = [1, 0], sizes = [7, 128], strides = [1, 1]} : vector<8x128xf32> to vector<7x128xf32>
    %11 = vector.extract_strided_slice %9 {offsets = [0, 0], sizes = [1, 128], strides = [1, 1]} : vector<8x128xf32> to vector<1x128xf32>
    %12 = tpu.concatenate %10, %11 in 0 : vector<7x128xf32>, vector<1x128xf32> -> vector<8x128xf32>
    %13 = arith.addf %5, %12 : vector<8x128xf32>
    %c0_13 = arith.constant 0 : index
    %c0_14 = arith.constant 0 : index
    %c0_15 = arith.constant 0 : index
    %14 = vector.load %arg6[%c0_13, %c0_14, %c0_15] : memref<1x8x128xf32, #tpu.memory_space<vmem>>, vector<1x8x128xf32>
    %15 = vector.shape_cast %14 : vector<1x8x128xf32> to vector<8x128xf32>
    %16 = vector.shape_cast %13 : vector<8x128xf32> to vector<1x8x128xf32>
    tpu.vector_store %arg6[%c0_13, %c0_14, %c0_15], %16 {strides = array<i32>} : memref<1x8x128xf32, #tpu.memory_space<vmem>>, vector<1x8x128xf32>,
    return
  }
  func.func @transform_0(%arg0: i32, %arg1: i32) -> (i32, i32, i32) {
    %c0_i32 = arith.constant 0 : i32
    %c0_i32_0 = arith.constant 0 : i32
    return %arg1, %arg0, %c0_i32 : i32, i32, i32
  }
  func.func @transform_1(%arg0: i32, %arg1: i32) -> (i32, i32, i32) {
    %c1_i32 = arith.constant 1 : i32
    %0 = arith.addi %arg0, %c1_i32 : i32
    %c1_i32_0 = arith.constant 1 : i32
    %1 = arith.muli %0, %c1_i32_0 : i32
    %c0_i32 = arith.constant 0 : i32
    %c0_i32_1 = arith.constant 0 : i32
    return %arg1, %1, %c0_i32 : i32, i32, i32
  }
  func.func @transform_2(%arg0: i32, %arg1: i32) -> (i32, i32) {
    %c0_i32 = arith.constant 0 : i32
    %c0_i32_0 = arith.constant 0 : i32
    %c0_i32_1 = arith.constant 0 : i32
    return %c0_i32, %c0_i32_0 : i32, i32
  }
  func.func @transform_3(%arg0: i32, %arg1: i32) -> (i32, i32) {
    %c0_i32 = arith.constant 0 : i32
    %c0_i32_0 = arith.constant 0 : i32
    %c0_i32_1 = arith.constant 0 : i32
    return %c0_i32, %c0_i32_0 : i32, i32
  }
  func.func @transform_4(%arg0: i32, %arg1: i32) -> (i32, i32, i32) {
    %c0_i32 = arith.constant 0 : i32
    %c0_i32_0 = arith.constant 0 : i32
    return %arg1, %arg0, %c0_i32 : i32, i32, i32
  }
}

</mosaic_0001>

<llo_original>
// kernel: _pqmf_forward_impl.1
$region0: #{_pqmf_forward_impl.1}
  #allocation0 [shape = 'u32[]', space=smem, size = 0x4, offset = 0x4, fixed_abs, tag = 'smem constant byte address 0x4 - core index']
  #allocation1 [shape = 'u32[144,128]{1,0:T(1,128)}', space=vmem, size = 0x12000, scoped, tag = 'internal scratch']
  %s0 = inlined_call_operand.vmem [shape: f32[2,24,128], index: 0, kind: input, shape index: {}, may-alias: {0,1}]
  %s1 = inlined_call_operand.vmem [shape: f32[2,24,128], index: 1, kind: input, shape index: {}, may-alias: {0,1}]
  %s2 = inlined_call_operand.vmem [shape: f32[128,128], index: 2, kind: input, shape index: {}]
  %s3 = inlined_call_operand.hbm [shape: f32[128,128], index: 3, kind: input, shape index: {}]
  %s4 = inlined_call_operand.vmem [shape: f32[2,16,128], index: 4, kind: output, shape index: {}]
  %s5 = sld [smem:[#allocation0]]
  $region53: #{_pqmf_forward_impl.1} parent=0
    _
  %s7 = ssub.s32 1, %s5
  %s8 = scalar_select 0, %s7, %s5
  $region1: #{_pqmf_forward_impl.1} parent=0
    #allocation2 [shape = 'u8[65536]{0}', space=vmem, size = 0x10000, scoped, tag = 'input window, operand 3, single buffered']
    #allocation3 [shape = 's32[2]{0}', space=sflag, size = 0x8, scoped, tag = 'scoped memory for _pqmf_forward_impl.1']
    %9 = vsyncpa [#allocation3], 0
    loop: start=0, step=1, limit=6
    $region2: #{_pqmf_forward_impl.1} parent=1 // loop_pre_header
      _
    $region3: #{_pqmf_forward_impl.1} parent=1 // loop_header
      %s11 = sphi 0, %s15
      %p12 = scmp.ge.s32.totalorder %s11, 6
      %s18 = sphi 0, %s30
      %s19 = sphi 0, %s26
      %s20 = sphi 0, %s18
      %s21 = sphi 0, %s19
      %s22 = sphi 0, %s20
      %s23 = sphi 0, %s21
      %s35 = sphi 0, %s37
      %s38 = sphi 0, %s35
      %s39 = sphi 0, %s38
      %s55 = sphi 0, %s39
      %s65 = sphi 0, %s67
      %s68 = sphi 0, %s65
      %s69 = sphi 0, %s68
      %s85 = sphi 0, %s69
      %s89 = sphi 0, %s89
      %s91 = sphi 0, %s89
      %s92 = sphi 0, %s91
      %s106 = sphi 0, %s92
      %s110 = sphi 0, %s110
      %s112 = sphi 0, %s110
      %s113 = sphi 0, %s112
      %s127 = sphi 0, %s113
      %s135 = sphi 0, %s137
      %s138 = sphi 0, %s135
      %s139 = sphi 0, %s138
      %s155 = sphi 0, %s139
    $region4: #{_pqmf_forward_impl.1} parent=1 // loop_header_branch
      %14 = sbr.rel (%p12) target = $region8
    $region5: #{_pqmf_forward_impl.1} parent=1 // loop_body
      %s16 = ssub.s32 %s11, 1
      %s17 = ssub.s32 %s11, 2
      %s24 = sadd.s32 1, %s19
      %p25 = scmp.ge.s32.totalorder %s24, 2
      %s26 = scalar_select %p25, 0, %s24
      %s27 = sadd.s32 1, %s18
      %s28 = scalar_select %p25, %s27, %s18
      %p29 = scmp.ge.s32.totalorder %s28, 2
      %s30 = scalar_select %p29, 0, %s28
      %s31 = ssub.s32 %s19, %s26
      %s32 = ssub.s32 %s18, %s30
      %s33 = sor.u32 %s31, %s32
      %p34 = scmp.eq.s32.totalorder %s33, 0
      %s36 = sadd.s32 %s35, 1
      %s37 = scalar_select %p34, %s35, %s36
      %p40 = pneg %p34
      %p41 = scmp.eq.s32.totalorder %s11, 3
      %p42 = por %p40, %p41
      %p43 = scmp.ne.s32.totalorder %s35, %s38
      %p44 = scmp.eq.s32.totalorder %s11, 0
      %p45 = por %p43, %p44
      %p46 = scmp.ne.s32.totalorder %s35, %s38
      %p47 = scmp.eq.s32.totalorder %s16, 3
      %p48 = por %p46, %p47
      %p49 = scmp.ne.s32.totalorder %s38, %s39
      %p50 = scmp.eq.s32.totalorder %s16, 0
      %p51 = por %p49, %p50
      %p52 = scmp.ne.s32.totalorder %s38, %s39
      %p53 = scmp.eq.s32.totalorder %s17, 3
      %p54 = por %p52, %p53
      %p56 = scmp.ne.s32.totalorder %s39, %s55
      %p57 = scmp.eq.s32.totalorder %s17, 0
      %p58 = por %p56, %p57
      %s59 = sadd.s32 %s18, 1
      %s60 = sadd.s32 %s30, 1
      %s61 = ssub.s32 %s19, %s26
      %s62 = ssub.s32 %s59, %s60
      %s63 = sor.u32 %s61, %s62
      %p64 = scmp.eq.s32.totalorder %s63, 0
      %s66 = sadd.s32 %s65, 1
      %s67 = scalar_select %p64, %s65, %s66
      %p70 = pneg %p64
      %p71 = scmp.eq.s32.totalorder %s11, 3
      %p72 = por %p70, %p71
      %p73 = scmp.ne.s32.totalorder %s65, %s68
      %p74 = scmp.eq.s32.totalorder %s11, 0
      %p75 = por %p73, %p74
      %p76 = scmp.ne.s32.totalorder %s65, %s68
      %p77 = scmp.eq.s32.totalorder %s16, 3
      %p78 = por %p76, %p77
      %p79 = scmp.ne.s32.totalorder %s68, %s69
      %p80 = scmp.eq.s32.totalorder %s16, 0
      %p81 = por %p79, %p80
      %p82 = scmp.ne.s32.totalorder %s68, %s69
      %p83 = scmp.eq.s32.totalorder %s17, 3
      %p84 = por %p82, %p83
      %p86 = scmp.ne.s32.totalorder %s69, %s85
      %p87 = scmp.eq.s32.totalorder %s17, 0
      %p88 = por %p86, %p87
      %s90 = sadd.s32 %s89, 1
      %p93 = scmp.eq.s32.totalorder %s11, 3
      %p94 = scmp.ne.s32.totalorder %s89, %s91
      %p95 = scmp.eq.s32.totalorder %s11, 0
      %p96 = por %p94, %p95
      %p97 = scmp.ne.s32.totalorder %s89, %s91
      %p98 = scmp.eq.s32.totalorder %s16, 3
      %p99 = por %p97, %p98
      %p100 = scmp.ne.s32.totalorder %s91, %s92
      %p101 = scmp.eq.s32.totalorder %s16, 0
      %p102 = por %p100, %p101
      %p103 = scmp.ne.s32.totalorder %s91, %s92
      %p104 = scmp.eq.s32.totalorder %s17, 3
      %p105 = por %p103, %p104
      %p107 = scmp.ne.s32.totalorder %s92, %s106
      %p108 = scmp.eq.s32.totalorder %s17, 0
      %p109 = por %p107, %p108
      %s111 = sadd.s32 %s110, 1
      %p114 = scmp.eq.s32.totalorder %s11, 3
      %p115 = scmp.ne.s32.totalorder %s110, %s112
      %p116 = scmp.eq.s32.totalorder %s11, 0
      %p117 = por %p115, %p116
      %p118 = scmp.ne.s32.totalorder %s110, %s112
      %p119 = scmp.eq.s32.totalorder %s16, 3
      %p120 = por %p118, %p119
      %p121 = scmp.ne.s32.totalorder %s112, %s113
      %p122 = scmp.eq.s32.totalorder %s16, 0
      %p123 = por %p121, %p122
      %p124 = scmp.ne.s32.totalorder %s112, %s113
      %p125 = scmp.eq.s32.totalorder %s17, 3
      %p126 = por %p124, %p125
      %p128 = scmp.ne.s32.totalorder %s113, %s127
      %p129 = scmp.eq.s32.totalorder %s17, 0
      %p130 = por %p128, %p129
      %s131 = ssub.s32 %s19, %s26
      %s132 = ssub.s32 %s18, %s30
      %s133 = sor.u32 %s131, %s132
      %p134 = scmp.eq.s32.totalorder %s133, 0
      %s136 = sadd.s32 %s135, 1
      %s137 = scalar_select %p134, %s135, %s136
      %p140 = pneg %p134
      %p141 = scmp.eq.s32.totalorder %s11, 3
      %p142 = por %p140, %p141
      %p143 = scmp.ne.s32.totalorder %s135, %s138
      %p144 = scmp.eq.s32.totalorder %s11, 0
      %p145 = por %p143, %p144
      %p146 = scmp.ne.s32.totalorder %s135, %s138
      %p147 = scmp.eq.s32.totalorder %s16, 3
      %p148 = por %p146, %p147
      %p149 = scmp.ne.s32.totalorder %s138, %s139
      %p150 = scmp.eq.s32.totalorder %s16, 0
      %p151 = por %p149, %p150
      %p152 = scmp.ne.s32.totalorder %s138, %s139
      %p153 = scmp.eq.s32.totalorder %s17, 3
      %p154 = por %p152, %p153
      %p156 = scmp.ne.s32.totalorder %s139, %s155
      %p157 = scmp.eq.s32.totalorder %s17, 0
      %p158 = por %p156, %p157
      %p159 = scmp.le.s32.totalorder 1, %s11
      %p160 = scmp.lt.s32.totalorder %s11, 5
      %p161 = pnand %p159, %p160
      %p162 = pneg %p161
      // Predicated region
      $region9: #{_pqmf_forward_impl.1} parent=5 // pred_check
        _
      $region10: #{_pqmf_forward_impl.1} parent=5 // pred_check_branch
        %164 = sbr.rel (%p161) target = $region12
      $region11: #{_pqmf_forward_impl.1} parent=5 // pred_region
        %s165 = ssub.s32 %s11, 1
        // Predicated region
        $region13: #{_pqmf_forward_impl.1} parent=11 // pred_check
          %p166 = pneg %p102
        $region14: #{_pqmf_forward_impl.1} parent=11 // pred_check_branch
          %168 = sbr.rel (%p166) target = $region16
        $region15: #{_pqmf_forward_impl.1} parent=11 // pred_region
          _
        $region16: #{_pqmf_forward_impl.1} parent=11 // pred_fallthru
          _
        // Predicated region
        $region17: #{_pqmf_forward_impl.1} parent=11 // pred_check
          %p169 = pneg %p123
        $region18: #{_pqmf_forward_impl.1} parent=11 // pred_check_branch
          %171 = sbr.rel (%p169) target = $region20
        $region19: #{_pqmf_forward_impl.1} parent=11 // pred_region
          %s173 = ssub.s32 2048, 2048
          %174 = vsyncadd [#allocation3], %s173
          %s175 = sshll.u32 [#allocation2], 4
          %s176 = int_to_ptr.vmem [resolvable:$true] %s175
          %181 = dma.hbm_to_vmem [thread:$0]  %s3, 2048, %s176, [#allocation3], 128, 128, 8
        $region20: #{_pqmf_forward_impl.1} parent=11 // pred_fallthru
          _
      $region12: #{_pqmf_forward_impl.1} parent=5 // pred_fallthru
        _
      %p182 = scmp.lt.s32.totalorder %s11, 4
      // Predicated region
      $region21: #{_pqmf_forward_impl.1} parent=5 // pred_check
        %p183 = pneg %p182
      $region22: #{_pqmf_forward_impl.1} parent=5 // pred_check_branch
        %185 = sbr.rel (%p183) target = $region24
      $region23: #{_pqmf_forward_impl.1} parent=5 // pred_region
        // Predicated region
        $region25: #{_pqmf_forward_impl.1} parent=23 // pred_check
          %p186 = pneg %p45
        $region26: #{_pqmf_forward_impl.1} parent=23 // pred_check_branch
          %188 = sbr.rel (%p186) target = $region28
        $region27: #{_pqmf_forward_impl.1} parent=23 // pred_region
          %p189 = scmp.lt.s32.totalorder %s19, 1
          %s190 = scalar_select %p189, %s19, 1
          %p191 = scmp.lt.s32.totalorder %s18, 2
          %s192 = scalar_select %p191, %s18, 2
          %s193 = smul.addr %s190, 3
          %s194 = sadd.s32 %s192, %s193
          %s195 = smul.addr %s194, 8
          %s196 = scalar_lea.vmem %s0, %s195
        $region28: #{_pqmf_forward_impl.1} parent=23 // pred_fallthru
          _
        // Predicated region
        $region29: #{_pqmf_forward_impl.1} parent=23 // pred_check
          %p197 = pneg %p75
        $region30: #{_pqmf_forward_impl.1} parent=23 // pred_check_branch
          %199 = sbr.rel (%p197) target = $region32
        $region31: #{_pqmf_forward_impl.1} parent=23 // pred_region
          %s200 = sadd.s32 %s18, 1
          %p201 = scmp.lt.s32.totalorder %s19, 1
          %s202 = scalar_select %p201, %s19, 1
          %p203 = scmp.lt.s32.totalorder %s200, 2
          %s204 = scalar_select %p203, %s200, 2
          %s205 = smul.addr %s202, 3
          %s206 = sadd.s32 %s204, %s205
          %s207 = smul.addr %s206, 8
          %s208 = scalar_lea.vmem %s1, %s207
          %s209 = sadd.s32 %s18, 1
        $region32: #{_pqmf_forward_impl.1} parent=23 // pred_fallthru
          _
      $region24: #{_pqmf_forward_impl.1} parent=5 // pred_fallthru
        _
      %p210 = scmp.le.s32.totalorder 1, %s11
      %p211 = scmp.lt.s32.totalorder %s11, 5
      %p212 = pnand %p210, %p211
      %p213 = pneg %p212
      // Predicated region
      $region33: #{_pqmf_forward_impl.1} parent=5 // pred_check
        _
      $region34: #{_pqmf_forward_impl.1} parent=5 // pred_check_branch
        %215 = sbr.rel (%p212) target = $region36
      $region35: #{_pqmf_forward_impl.1} parent=5 // pred_region
        %s216 = ssub.s32 %s11, 1
        // Predicated region
        $region37: #{_pqmf_forward_impl.1} parent=35 // pred_check
          %p217 = pneg %p123
        $region38: #{_pqmf_forward_impl.1} parent=35 // pred_check_branch
          %219 = sbr.rel (%p217) target = $region40
        $region39: #{_pqmf_forward_impl.1} parent=35 // pred_region
          %220 = dma.done [#allocation3], 2048
        $region40: #{_pqmf_forward_impl.1} parent=35 // pred_fallthru
          _
        %p221 = scmp.lt.s32.totalorder %s21, 1
        %s222 = scalar_select %p221, %s21, 1
        %p223 = scmp.lt.s32.totalorder %s20, 2
        %s224 = scalar_select %p223, %s20, 2
        %s225 = smul.addr %s222, 3
        %s226 = sadd.s32 %s224, %s225
        %s227 = smul.addr %s226, 8
        %s228 = scalar_lea.vmem %s0, %s227
        %p229 = pneg %p51
        %p230 = pneg %p48
        %s231 = sadd.s32 %s20, 1
        %p232 = scmp.lt.s32.totalorder %s21, 1
        %s233 = scalar_select %p232, %s21, 1
        %p234 = scmp.lt.s32.totalorder %s231, 2
        %s235 = scalar_select %p234, %s231, 2
        %s236 = smul.addr %s233, 3
        %s237 = sadd.s32 %s235, %s236
        %s238 = smul.addr %s237, 8
        %s239 = scalar_lea.vmem %s1, %s238
        %p240 = pneg %p81
        %p241 = pneg %p78
        %p242 = pneg %p102
        %p243 = pneg %p99
        %p244 = pneg %p123
        %p245 = pneg %p120
        %p246 = pneg %p151
        %p247 = pneg %p148
        %p248 = scmp.lt.s32.totalorder %s21, 1
        %s249 = scalar_select %p248, %s21, 1
        %p250 = scmp.lt.s32.totalorder %s20, 1
        %s251 = scalar_select %p250, %s20, 1
        %s252 = smul.addr %s249, 2
        %s253 = sadd.s32 %s251, %s252
        %s254 = smul.addr %s253, 8
        %s255 = scalar_lea.vmem %s4, %s254
        %p256 = scmp.lt.s32.totalorder %s21, 1
        %s257 = scalar_select %p256, %s21, 1
        %p258 = scmp.lt.s32.totalorder %s20, 2
        %s259 = scalar_select %p258, %s20, 2
        %s260 = smul.addr %s257, 3
        %s261 = sadd.s32 %s259, %s260
        %s262 = smul.addr %s261, 8
        %s263 = scalar_lea.vmem %s0, %s262
        %s264 = sadd.s32 %s20, 1
        %p265 = scmp.lt.s32.totalorder %s21, 1
        %s266 = scalar_select %p265, %s21, 1
        %p267 = scmp.lt.s32.totalorder %s264, 2
        %s268 = scalar_select %p267, %s264, 2
        %s269 = smul.addr %s266, 3
        %s270 = sadd.s32 %s268, %s269
        %s271 = smul.addr %s270, 8
        %s272 = scalar_lea.vmem %s1, %s271
        %s273 = sadd.s32 %s20, 1
        %p274 = scmp.lt.s32.totalorder %s21, 1
        %s275 = scalar_select %p274, %s21, 1
        %p276 = scmp.lt.s32.totalorder %s20, 1
        %s277 = scalar_select %p276, %s20, 1
        %s278 = smul.addr %s275, 2
        %s279 = sadd.s32 %s277, %s278
        %s280 = smul.addr %s279, 8
        %s281 = scalar_lea.vmem %s4, %s280
        %v282 = vld [vmem:[%s263] sm:$0xff]
        %v283 = vld [vmem:[%s272] sm:$0xff]
        %v284 = vld [vmem:[%s2] sm:$0xff]
        %v285 = vld [vmem:[%s2 + $0x8] sm:$0xff]
        %v286 = vld [vmem:[%s2 + $0x10] sm:$0xff]
        %v287 = vld [vmem:[%s2 + $0x18] sm:$0xff]
        %v288 = vld [vmem:[%s2 + $0x20] sm:$0xff]
        %v289 = vld [vmem:[%s2 + $0x28] sm:$0xff]
        %v290 = vld [vmem:[%s2 + $0x30] sm:$0xff]
        %v291 = vld [vmem:[%s2 + $0x38] sm:$0xff]
        %v292 = vld [vmem:[%s2 + $0x40] sm:$0xff]
        %v293 = vld [vmem:[%s2 + $0x48] sm:$0xff]
        %v294 = vld [vmem:[%s2 + $0x50] sm:$0xff]
        %v295 = vld [vmem:[%s2 + $0x58] sm:$0xff]
        %v296 = vld [vmem:[%s2 + $0x60] sm:$0xff]
        %v297 = vld [vmem:[%s2 + $0x68] sm:$0xff]
        %v298 = vld [vmem:[%s2 + $0x70] sm:$0xff]
        %v299 = vld [vmem:[%s2 + $0x78] sm:$0xff]
        %v300 = vld [vmem:[#allocation2] sm:$0xff]
        %v301 = vld [vmem:[#allocation2 + $0x8] sm:$0xff]
        %v302 = vld [vmem:[#allocation2 + $0x10] sm:$0xff]
        %v303 = vld [vmem:[#allocation2 + $0x18] sm:$0xff]
        %v304 = vld [vmem:[#allocation2 + $0x20] sm:$0xff]
        %v305 = vld [vmem:[#allocation2 + $0x28] sm:$0xff]
        %v306 = vld [vmem:[#allocation2 + $0x30] sm:$0xff]
        %v307 = vld [vmem:[#allocation2 + $0x38] sm:$0xff]
        %v308 = vld [vmem:[#allocation2 + $0x40] sm:$0xff]
        %v309 = vld [vmem:[#allocation2 + $0x48] sm:$0xff]
        %v310 = vld [vmem:[#allocation2 + $0x50] sm:$0xff]
        %v311 = vld [vmem:[#allocation2 + $0x58] sm:$0xff]
        %v312 = vld [vmem:[#allocation2 + $0x60] sm:$0xff]
        %v313 = vld [vmem:[#allocation2 + $0x68] sm:$0xff]
        %v314 = vld [vmem:[#allocation2 + $0x70] sm:$0xff]
        %v315 = vld [vmem:[#allocation2 + $0x78] sm:$0xff]
        %316 = vmatprep.subr.mxu0 0.0
        %317 = vmatpush1.msra.mxu0 %v315
        %318 = vmatprep.subr.mxu0 0.0
        %319 = vmatpush1.msra.mxu0 %v314
        %320 = vmatprep.subr.mxu0 0.0
        %321 = vmatpush1.msra.mxu0 %v313
        %322 = vmatprep.subr.mxu0 0.0
        %323 = vmatpush1.msra.mxu0 %v312
        %324 = vmatprep.subr.mxu0 0.0
        %325 = vmatpush1.msra.mxu0 %v311
        %326 = vmatprep.subr.mxu0 0.0
        %327 = vmatpush1.msra.mxu0 %v310
        %328 = vmatprep.subr.mxu0 0.0
        %329 = vmatpush1.msra.mxu0 %v309
        %330 = vmatprep.subr.mxu0 0.0
        %331 = vmatpush1.msra.mxu0 %v308
        %332 = vmatprep.subr.mxu0 0.0
        %333 = vmatpush1.msra.mxu0 %v307
        %334 = vmatprep.subr.mxu0 0.0
        %335 = vmatpush1.msra.mxu0 %v306
        %336 = vmatprep.subr.mxu0 0.0
        %337 = vmatpush1.msra.mxu0 %v305
        %338 = vmatprep.subr.mxu0 0.0
        %339 = vmatpush1.msra.mxu0 %v304
        %340 = vmatprep.subr.mxu0 0.0
        %341 = vmatpush1.msra.mxu0 %v303
        %342 = vmatprep.subr.mxu0 0.0
        %343 = vmatpush1.msra.mxu0 %v302
        %344 = vmatprep.subr.mxu0 0.0
        %345 = vmatpush1.msra.mxu0 %v301
        %346 = vmatprep.subr.mxu0 0.0
        %347 = vmatpush1.msra.mxu0 %v300
        %348 = vmatprep.subr.mxu0 0.0
        %349 = vmatpush2.msra.mxu0 0.0
        %350 = vmatprep.subr.mxu0 0.0
        %351 = vmatpush2.msra.mxu0 0.0
        %352 = vmatprep.subr.mxu0 0.0
        %353 = vmatpush2.msra.mxu0 0.0
        %354 = vmatprep.subr.mxu0 0.0
        %355 = vmatpush2.msra.mxu0 0.0
        %356 = vmatprep.subr.mxu0 0.0
        %357 = vmatpush2.msra.mxu0 0.0
        %358 = vmatprep.subr.mxu0 0.0
        %359 = vmatpush2.msra.mxu0 0.0
        %360 = vmatprep.subr.mxu0 0.0
        %361 = vmatpush2.msra.mxu0 0.0
        %362 = vmatprep.subr.mxu0 0.0
        %363 = vmatpush2.msra.mxu0 0.0
        %364 = vmatprep.subr.mxu0 0.0
        %365 = vmatpush2.msra.mxu0 0.0
        %366 = vmatprep.subr.mxu0 0.0
        %367 = vmatpush2.msra.mxu0 0.0
        %368 = vmatprep.subr.mxu0 0.0
        %369 = vmatpush2.msra.mxu0 0.0
        %370 = vmatprep.subr.mxu0 0.0
        %371 = vmatpush2.msra.mxu0 0.0
        %372 = vmatprep.subr.mxu0 0.0
        %373 = vmatpush2.msra.mxu0 0.0
        %374 = vmatprep.subr.mxu0 0.0
        %375 = vmatpush2.msra.mxu0 0.0
        %376 = vmatprep.subr.mxu0 0.0
        %377 = vmatpush2.msra.mxu0 0.0
        %378 = vmatprep.subr.mxu0 0.0
        %379 = vmatpush2.msra.mxu0 0.0
        %380 = vmatprep.mubr.f32.mxu0 0.0
        %381 = vmatmul.mubr.f32.gmra.mxu0 %v282
        %v382 = vpop.f32.mrf.mxu0
        %v383 = vadd.f32 0.0, %v382
        %v384 = vpop.f32.mrf.mxu0
        %385 = vdwg.mxu0
        %386 = vmatprep.subr.mxu0 0.0
        %387 = vmatpush1.msra.mxu0 %v315
        %388 = vmatprep.subr.mxu0 0.0
        %389 = vmatpush1.msra.mxu0 %v314
        %390 = vmatprep.subr.mxu0 0.0
        %391 = vmatpush1.msra.mxu0 %v313
        %392 = vmatprep.subr.mxu0 0.0
        %393 = vmatpush1.msra.mxu0 %v312
        %394 = vmatprep.subr.mxu0 0.0
        %395 = vmatpush1.msra.mxu0 %v311
        %396 = vmatprep.subr.mxu0 0.0
        %397 = vmatpush1.msra.mxu0 %v310
        %398 = vmatprep.subr.mxu0 0.0
        %399 = vmatpush1.msra.mxu0 %v309
        %400 = vmatprep.subr.mxu0 0.0
        %401 = vmatpush1.msra.mxu0 %v308
        %402 = vmatprep.subr.mxu0 0.0
        %403 = vmatpush1.msra.mxu0 %v307
        %404 = vmatprep.subr.mxu0 0.0
        %405 = vmatpush1.msra.mxu0 %v306
        %406 = vmatprep.subr.mxu0 0.0
        %407 = vmatpush1.msra.mxu0 %v305
        %408 = vmatprep.subr.mxu0 0.0
        %409 = vmatpush1.msra.mxu0 %v304
        %410 = vmatprep.subr.mxu0 0.0
        %411 = vmatpush1.msra.mxu0 %v303
        %412 = vmatprep.subr.mxu0 0.0
        %413 = vmatpush1.msra.mxu0 %v302
        %414 = vmatprep.subr.mxu0 0.0
        %415 = vmatpush1.msra.mxu0 %v301
        %416 = vmatprep.subr.mxu0 0.0
        %417 = vmatpush1.msra.mxu0 %v300
        %418 = vmatprep.subr.mxu0 0.0
        %419 = vmatpush2.msra.mxu0 0.0
        %420 = vmatprep.subr.mxu0 0.0
        %421 = vmatpush2.msra.mxu0 0.0
        %422 = vmatprep.subr.mxu0 0.0
        %423 = vmatpush2.msra.mxu0 0.0
        %424 = vmatprep.subr.mxu0 0.0
        %425 = vmatpush2.msra.mxu0 0.0
        %426 = vmatprep.subr.mxu0 0.0
        %427 = vmatpush2.msra.mxu0 0.0
        %428 = vmatprep.subr.mxu0 0.0
        %429 = vmatpush2.msra.mxu0 0.0
        %430 = vmatprep.subr.mxu0 0.0
        %431 = vmatpush2.msra.mxu0 0.0
        %432 = vmatprep.subr.mxu0 0.0
        %433 = vmatpush2.msra.mxu0 0.0
        %434 = vmatprep.subr.mxu0 0.0
        %435 = vmatpush2.msra.mxu0 0.0
        %436 = vmatprep.subr.mxu0 0.0
        %437 = vmatpush2.msra.mxu0 0.0
        %438 = vmatprep.subr.mxu0 0.0
        %439 = vmatpush2.msra.mxu0 0.0
        %440 = vmatprep.subr.mxu0 0.0
        %441 = vmatpush2.msra.mxu0 0.0
        %442 = vmatprep.subr.mxu0 0.0
        %443 = vmatpush2.msra.mxu0 0.0
        %444 = vmatprep.subr.mxu0 0.0
        %445 = vmatpush2.msra.mxu0 0.0
        %446 = vmatprep.subr.mxu0 0.0
        %447 = vmatpush2.msra.mxu0 0.0
        %448 = vmatprep.subr.mxu0 0.0
        %449 = vmatpush2.msra.mxu0 0.0
        %450 = vmatprep.mubr.f32.mxu0 0.0
        %451 = vmatmul.mubr.f32.gmra.mxu0 %v283
        %v452 = vpop.f32.mrf.mxu0
        %v453 = vadd.f32 0.0, %v452
        %v454 = vpop.f32.mrf.mxu0
        %455 = vdwg.mxu0
        %v457 = vrot.slane %v383, 1
        %v460 = vrot.slane %v453, 1
        %vm462 = vcmask 1046528
        %v463 = vsel %vm462, %v457, %v460
        %464 = vmatprep.subr.mxu0 0.0
        %465 = vmatpush1.msra.mxu0 %v299
        %466 = vmatprep.subr.mxu0 0.0
        %467 = vmatpush1.msra.mxu0 %v298
        %468 = vmatprep.subr.mxu0 0.0
        %469 = vmatpush1.msra.mxu0 %v297
        %470 = vmatprep.subr.mxu0 0.0
        %471 = vmatpush1.msra.mxu0 %v296
        %472 = vmatprep.subr.mxu0 0.0
        %473 = vmatpush1.msra.mxu0 %v295
        %474 = vmatprep.subr.mxu0 0.0
        %475 = vmatpush1.msra.mxu0 %v294
        %476 = vmatprep.subr.mxu0 0.0
        %477 = vmatpush1.msra.mxu0 %v293
        %478 = vmatprep.subr.mxu0 0.0
        %479 = vmatpush1.msra.mxu0 %v292
        %480 = vmatprep.subr.mxu0 0.0
        %481 = vmatpush1.msra.mxu0 %v291
        %482 = vmatprep.subr.mxu0 0.0
        %483 = vmatpush1.msra.mxu0 %v290
        %484 = vmatprep.subr.mxu0 0.0
        %485 = vmatpush1.msra.mxu0 %v289
        %486 = vmatprep.subr.mxu0 0.0
        %487 = vmatpush1.msra.mxu0 %v288
        %488 = vmatprep.subr.mxu0 0.0
        %489 = vmatpush1.msra.mxu0 %v287
        %490 = vmatprep.subr.mxu0 0.0
        %491 = vmatpush1.msra.mxu0 %v286
        %492 = vmatprep.subr.mxu0 0.0
        %493 = vmatpush1.msra.mxu0 %v285
        %494 = vmatprep.subr.mxu0 0.0
        %495 = vmatpush1.msra.mxu0 %v284
        %496 = vmatprep.subr.mxu0 0.0
        %497 = vmatpush2.msra.mxu0 0.0
        %498 = vmatprep.subr.mxu0 0.0
        %499 = vmatpush2.msra.mxu0 0.0
        %500 = vmatprep.subr.mxu0 0.0
        %501 = vmatpush2.msra.mxu0 0.0
        %502 = vmatprep.subr.mxu0 0.0
        %503 = vmatpush2.msra.mxu0 0.0
        %504 = vmatprep.subr.mxu0 0.0
        %505 = vmatpush2.msra.mxu0 0.0
        %506 = vmatprep.subr.mxu0 0.0
        %507 = vmatpush2.msra.mxu0 0.0
        %508 = vmatprep.subr.mxu0 0.0
        %509 = vmatpush2.msra.mxu0 0.0
        %510 = vmatprep.subr.mxu0 0.0
        %511 = vmatpush2.msra.mxu0 0.0
        %512 = vmatprep.subr.mxu0 0.0
        %513 = vmatpush2.msra.mxu0 0.0
        %514 = vmatprep.subr.mxu0 0.0
        %515 = vmatpush2.msra.mxu0 0.0
        %516 = vmatprep.subr.mxu0 0.0
        %517 = vmatpush2.msra.mxu0 0.0
        %518 = vmatprep.subr.mxu0 0.0
        %519 = vmatpush2.msra.mxu0 0.0
        %520 = vmatprep.subr.mxu0 0.0
        %521 = vmatpush2.msra.mxu0 0.0
        %522 = vmatprep.subr.mxu0 0.0
        %523 = vmatpush2.msra.mxu0 0.0
        %524 = vmatprep.subr.mxu0 0.0
        %525 = vmatpush2.msra.mxu0 0.0
        %526 = vmatprep.subr.mxu0 0.0
        %527 = vmatpush2.msra.mxu0 0.0
        %528 = vmatprep.mubr.f32.mxu0 0.0
        %529 = vmatmul.mubr.f32.gmra.mxu0 %v282
        %v530 = vpop.f32.mrf.mxu0
        %v531 = vadd.f32 %v463, %v530
        %v532 = vpop.f32.mrf.mxu0
        %533 = vdwg.mxu0
        %534 = vst [vmem:[%s281] sm:$0xff] %v531
        %p535 = scmp.lt.s32.totalorder %s21, 1
        %s536 = scalar_select %p535, %s21, 1
        %p537 = scmp.lt.s32.totalorder %s20, 1
        %s538 = scalar_select %p537, %s20, 1
        %s539 = smul.addr %s536, 2
        %s540 = sadd.s32 %s538, %s539
        %s541 = smul.addr %s540, 8
        %s542 = scalar_lea.vmem %s4, %s541
        // Predicated region
        $region41: #{_pqmf_forward_impl.1} parent=35 // pred_check
          %p543 = pneg %p148
        $region42: #{_pqmf_forward_impl.1} parent=35 // pred_check_branch
          %545 = sbr.rel (%p543) target = $region44
        $region43: #{_pqmf_forward_impl.1} parent=35 // pred_region
          _
        $region44: #{_pqmf_forward_impl.1} parent=35 // pred_fallthru
          _
      $region36: #{_pqmf_forward_impl.1} parent=5 // pred_fallthru
        _
      %p546 = scmp.le.s32.totalorder 2, %s11
      // Predicated region
      $region45: #{_pqmf_forward_impl.1} parent=5 // pred_check
        %p547 = pneg %p546
      $region46: #{_pqmf_forward_impl.1} parent=5 // pred_check_branch
        %549 = sbr.rel (%p547) target = $region48
      $region47: #{_pqmf_forward_impl.1} parent=5 // pred_region
        %s550 = ssub.s32 %s11, 2
        // Predicated region
        $region49: #{_pqmf_forward_impl.1} parent=47 // pred_check
          %p551 = pneg %p154
        $region50: #{_pqmf_forward_impl.1} parent=47 // pred_check_branch
          %553 = sbr.rel (%p551) target = $region52
        $region51: #{_pqmf_forward_impl.1} parent=47 // pred_region
          %p554 = scmp.lt.s32.totalorder %s23, 1
          %s555 = scalar_select %p554, %s23, 1
          %p556 = scmp.lt.s32.totalorder %s22, 1
          %s557 = scalar_select %p556, %s22, 1
          %s558 = smul.addr %s555, 2
          %s559 = sadd.s32 %s557, %s558
          %s560 = smul.addr %s559, 8
          %s561 = scalar_lea.vmem %s4, %s560
        $region52: #{_pqmf_forward_impl.1} parent=47 // pred_fallthru
          _
      $region48: #{_pqmf_forward_impl.1} parent=5 // pred_fallthru
        _
    $region6: #{_pqmf_forward_impl.1} parent=1 // loop_footer
      %s15 = sadd.s32 1, %s11
    $region7: #{_pqmf_forward_impl.1} parent=1 // loop_footer_branch
      %10 = sbr.rel target = $region3
    $region8: #{_pqmf_forward_impl.1} parent=1 // loop_exit
      _
    %562 = vsyncpa [#allocation3], 1
    %s563 = scalar_lea.sflag [#allocation3], 1
    %564 = vsyncpa %s563, 1

</llo_original>
